<compile_context>
chip_gen: v5e
topology: v5e:2x2
jax: 0.10.0
libtpu: 0.0.40
codegen_flags: <defaults>
</compile_context>

<pallas_src>
import jax
import jax.numpy as jnp
from jax import lax
from jax.experimental import pallas as pl
from jax.experimental.pallas import tpu as pltpu


def _conv_gemm_kernel(w_ref, x_ref, b_ref, o_ref):
    """One output tile: (Cout, K) @ (K, TM) + bias -> (Cout, TM).

    w_ref : (Cout, K)   flattened conv weights (K = KH*KW*Cin)
    x_ref : (K, TM)     im2col slab tile (M on the lane axis)
    b_ref : (Cout, 1)   bias (broadcast over lanes)
    o_ref : (Cout, TM)  output tile, lane-dense
    """
    o_ref[...] = (
        jnp.dot(w_ref[...], x_ref[...], preferred_element_type=jnp.float32)
        + b_ref[...]
    ).astype(o_ref.dtype)


def conv2d_pallas(x_nchw, weight_oihw, bias):
    """Valid (no padding), stride-1 2D convolution. x: NCHW, weight: OIHW."""
    N, Cin, H, W = x_nchw.shape
    Cout, Cin_w, KH, KW = weight_oihw.shape
    assert Cin == Cin_w
    Ho, Wo = H - KH + 1, W - KW + 1
    M = N * Ho * Wo
    K = KH * KW * Cin

    # ---- tiling: M on the lane axis, padded to a multiple of 128 ------------
    if M > 512:
        TM = 512
    else:
        TM = ((M + 127) // 128) * 128
    Mp = ((M + TM - 1) // TM) * TM

    # ---- glue (plain JAX): single im2col slab, (K, M) with M innermost ------
    # Channel-leading view so each tap slice is already (Cin, N, Ho, Wo).
    x_cnhw = jnp.transpose(x_nchw, (1, 0, 2, 3))
    taps = []
    for kh in range(KH):
        for kw in range(KW):
            taps.append(x_cnhw[:, :, kh:kh + Ho, kw:kw + Wo].reshape(Cin, M))
    xt = jnp.concatenate(taps, axis=0)                    # (K, M), K-order = (kh, kw, cin)
    if Mp != M:
        xt = jnp.pad(xt, ((0, 0), (0, Mp - M)))

    # Weights -> (Cout, K) with matching (kh, kw, cin) ordering.
    wt = jnp.transpose(weight_oihw, (0, 2, 3, 1)).reshape(Cout, K)
    b2 = bias.reshape(Cout, 1)

    # ---- hot path: one lane-dense GEMM per M tile ---------------------------
    out_t = pl.pallas_call(
        _conv_gemm_kernel,
        out_shape=jax.ShapeDtypeStruct((Cout, Mp), jnp.float32),
        grid_spec=pltpu.PrefetchScalarGridSpec(
            num_scalar_prefetch=0,
            grid=(Mp // TM,),
            in_specs=[
                pl.BlockSpec((Cout, K), lambda i: (0, 0)),
                pl.BlockSpec((K, TM), lambda i: (0, i)),
                pl.BlockSpec((Cout, 1), lambda i: (0, 0)),
            ],
            out_specs=pl.BlockSpec((Cout, TM), lambda i: (0, i)),
        ),
        compiler_params=pltpu.CompilerParams(
            dimension_semantics=("parallel",),
        ),
    )(wt, xt, b2)

    # (Cout, Mp) -> strip padding -> (Cout, N, Ho, Wo) -> NCHW
    out = out_t[:, :M].reshape(Cout, N, Ho, Wo)
    return jnp.transpose(out, (1, 0, 2, 3))


class MyModuleJax:
    """JAX/Pallas equivalent of the PyTorch MyModule (Conv2d(16,16,3))."""

    def __init__(self, key):
        kw_, kb_ = jax.random.split(key)
        fan_in = 16 * 3 * 3
        bound = 1.0 / jnp.sqrt(fan_in)
        # deterministic synthetic init (PyTorch-style uniform bounds)
        self.weight = jax.random.uniform(
            kw_, (16, 16, 3, 3), jnp.float32, minval=-bound, maxval=bound
        )
        self.bias = jax.random.uniform(
            kb_, (16,), jnp.float32, minval=-bound, maxval=bound
        )

    def __call__(self, x):
        return conv2d_pallas(x, self.weight, self.bias)


if __name__ == "__main__":
    key = jax.random.PRNGKey(0)
    k_params, k_x = jax.random.split(key)

    module = MyModuleJax(k_params)

    # Small input consistent with the module: NCHW, channels fixed at 16.
    x = jax.random.normal(k_x, (2, 16, 16, 16), dtype=jnp.float32)

    out = module(x)
    out = jax.block_until_ready(out)
    assert out.shape == (2, 16, 14, 14), out.shape

    # Correctness check against XLA's native convolution.
    ref = lax.conv_general_dilated(
        x, module.weight,
        window_strides=(1, 1), padding="VALID",
        dimension_numbers=("NCHW", "OIHW", "NCHW"),
    ) + module.bias.reshape(1, 16, 1, 1)
    assert jnp.allclose(out, ref, atol=1e-4, rtol=1e-4), float(
        jnp.max(jnp.abs(out - ref))
    )

    print("KERNEL_OK")
</pallas_src>

<mosaic_0001>
module attributes {stable_mosaic.version = 11 : i64} {
  func.func @_conv_gemm_kernel(%arg0: i32, %arg1: memref<16x144xf32, #tpu.memory_space<vmem>>, %arg2: memref<144x512xf32, #tpu.memory_space<vmem>>, %arg3: memref<16x1xf32, #tpu.memory_space<vmem>>, %arg4: memref<16x512xf32, #tpu.memory_space<vmem>>) attributes {dimension_semantics = [#tpu.dimension_semantics<parallel>], iteration_bounds = array<i64: 1>, scalar_prefetch = 0 : i64, scratch_operands = 0 : i64, tpu.core_type = #tpu.core_type<tc>, window_params = [{pipeline_mode = #tpu.pipeline_mode<synchronous>, transform_indices = @transform_0, window_bounds = array<i64: 16, 144>}, {transform_indices = @transform_1, window_bounds = array<i64: 144, 512>}, {pipeline_mode = #tpu.pipeline_mode<synchronous>, transform_indices = @transform_2, window_bounds = array<i64: 16, 1>}, {transform_indices = @transform_3, window_bounds = array<i64: 16, 512>}]} {
    %c0 = arith.constant 0 : index
    %c0_0 = arith.constant 0 : index
    %0 = vector.load %arg1[%c0, %c0_0] : memref<16x144xf32, #tpu.memory_space<vmem>>, vector<16x144xf32>
    %c0_1 = arith.constant 0 : index
    %c0_2 = arith.constant 0 : index
    %1 = vector.load %arg2[%c0_1, %c0_2] : memref<144x512xf32, #tpu.memory_space<vmem>>, vector<144x512xf32>
    %cst = arith.constant dense<0.000000e+00> : vector<16x512xf32>
    %2 = tpu.matmul %0, %1, %cst {dimension_numbers = #tpu.dot_dimension_numbers<[1], [0], [0], [1], [0, 0, 1, 1], [], []>} : vector<16x144xf32>, vector<144x512xf32>, vector<16x512xf32> -> vector<16x512xf32>
    %c0_3 = arith.constant 0 : index
    %c0_4 = arith.constant 0 : index
    %3 = vector.load %arg3[%c0_3, %c0_4] : memref<16x1xf32, #tpu.memory_space<vmem>>, vector<16x1xf32>
    %4 = vector.broadcast %3 : vector<16x1xf32> to vector<16x512xf32>
    %5 = arith.addf %2, %4 : vector<16x512xf32>
    %c0_5 = arith.constant 0 : index
    %c0_6 = arith.constant 0 : index
    %6 = vector.load %arg4[%c0_5, %c0_6] : memref<16x512xf32, #tpu.memory_space<vmem>>, vector<16x512xf32>
    tpu.vector_store %arg4[%c0_5, %c0_6], %5 {strides = array<i32>} : memref<16x512xf32, #tpu.memory_space<vmem>>, vector<16x512xf32>,
    return
  }
  func.func @transform_0(%arg0: i32) -> (i32, i32) {
    %c0_i32 = arith.constant 0 : i32
    %c0_i32_0 = arith.constant 0 : i32
    %c0_i32_1 = arith.constant 0 : i32
    return %c0_i32, %c0_i32_0 : i32, i32
  }
  func.func @transform_1(%arg0: i32) -> (i32, i32) {
    %c0_i32 = arith.constant 0 : i32
    %c0_i32_0 = arith.constant 0 : i32
    return %c0_i32, %arg0 : i32, i32
  }
  func.func @transform_2(%arg0: i32) -> (i32, i32) {
    %c0_i32 = arith.constant 0 : i32
    %c0_i32_0 = arith.constant 0 : i32
    %c0_i32_1 = arith.constant 0 : i32
    return %c0_i32, %c0_i32_0 : i32, i32
  }
  func.func @transform_3(%arg0: i32) -> (i32, i32) {
    %c0_i32 = arith.constant 0 : i32
    %c0_i32_0 = arith.constant 0 : i32
    return %c0_i32, %arg0 : i32, i32
  }
}

</mosaic_0001>

<llo_original>
// kernel: tpu_custom_call.1
$region0: #{tpu_custom_call.1}
  #allocation0 [shape = 'u32[]', space=smem, size = 0x4, offset = 0x4, fixed_abs, tag = 'smem constant byte address 0x4 - core index']
  #allocation1 [shape = 'u32[72,128]{1,0:T(1,128)}', space=vmem, size = 0x9000, scoped, tag = 'internal scratch']
  %s0 = inlined_call_operand.hbm [shape: f32[16,144], index: 0, kind: input, shape index: {}]
  %s1 = inlined_call_operand.hbm [shape: f32[144,512], index: 1, kind: input, shape index: {}]
  %s2 = inlined_call_operand.vmem [shape: f32[16,1], index: 2, kind: input, shape index: {}]
  %s3 = inlined_call_operand.hbm [shape: f32[16,512], index: 3, kind: output, shape index: {}]
  %s4 = sld [smem:[#allocation0]]
  $region30: #{tpu_custom_call.1} parent=0
    _
  %s6 = ssub.s32 1, %s4
  %s7 = scalar_select 0, %s6, %s4
  $region1: #{tpu_custom_call.1} parent=0
    #allocation2 [shape = 'u8[16384]{0}', space=vmem, size = 0x4000, scoped, tag = 'input window, operand 0, single buffered']
    #allocation3 [shape = 's32[1]{0}', space=sflag, size = 0x4, scoped, tag = 'scoped memory for tpu_custom_call.1']
    #allocation4 [shape = 's32[1]{0}', space=sflag, size = 0x4, scoped, tag = 'scoped memory for tpu_custom_call.1']
    #allocation5 [shape = 'u8[294912]{0}', space=vmem, size = 0x48000, scoped, tag = 'input window, operand 1, single buffered']
    #allocation6 [shape = 's32[1]{0}', space=sflag, size = 0x4, scoped, tag = 'scoped memory for tpu_custom_call.1']
    #allocation7 [shape = 'u8[32768]{0}', space=vmem, size = 0x8000, scoped, tag = 'output window, operand 0, single buffered']
    %8 = vsyncpa [#allocation3], 0
    %9 = vsyncpa [#allocation6], 0
    %10 = vsyncpa [#allocation4], 0
    // Predicated region
    $region2: #{tpu_custom_call.1} parent=1 // pred_check
      _
    $region3: #{tpu_custom_call.1} parent=1 // pred_check_branch
      %12 = sbr.rel (0) target = $region5
    $region4: #{tpu_custom_call.1} parent=1 // pred_region
      %14 = vsyncadd [#allocation3], 0
      %s15 = sshll.u32 %s0, 4
      %s16 = int_to_ptr.hbm [resolvable:$true] %s15
      %s17 = sshll.u32 [#allocation2], 4
      %s18 = int_to_ptr.vmem [resolvable:$true] %s17
      %23 = dma.hbm_to_vmem [thread:$0]  %s16, 512, %s18, [#allocation3], 256, 256, 16
    $region5: #{tpu_custom_call.1} parent=1 // pred_fallthru
      _
    // Predicated region
    $region6: #{tpu_custom_call.1} parent=1 // pred_check
      _
    $region7: #{tpu_custom_call.1} parent=1 // pred_check_branch
      %25 = sbr.rel (0) target = $region9
    $region8: #{tpu_custom_call.1} parent=1 // pred_region
      %27 = vsyncadd [#allocation6], 0
      %s28 = sshll.u32 %s1, 4
      %s29 = int_to_ptr.hbm [resolvable:$true] %s28
      %s30 = sshll.u32 [#allocation5], 4
      %s31 = int_to_ptr.vmem [resolvable:$true] %s30
      %36 = dma.hbm_to_vmem [thread:$0]  %s29, 9216, %s31, [#allocation6], 512, 512, 32
    $region9: #{tpu_custom_call.1} parent=1 // pred_fallthru
      _
    // Predicated region
    $region10: #{tpu_custom_call.1} parent=1 // pred_check
      _
    $region11: #{tpu_custom_call.1} parent=1 // pred_check_branch
      %38 = sbr.rel (0) target = $region13
    $region12: #{tpu_custom_call.1} parent=1 // pred_region
      _
    $region13: #{tpu_custom_call.1} parent=1 // pred_fallthru
      _
    // Predicated region
    $region14: #{tpu_custom_call.1} parent=1 // pred_check
      _
    $region15: #{tpu_custom_call.1} parent=1 // pred_check_branch
      %40 = sbr.rel (0) target = $region17
    $region16: #{tpu_custom_call.1} parent=1 // pred_region
      %42 = dma.done [#allocation3], 512
    $region17: #{tpu_custom_call.1} parent=1 // pred_fallthru
      _
    // Predicated region
    $region18: #{tpu_custom_call.1} parent=1 // pred_check
      _
    $region19: #{tpu_custom_call.1} parent=1 // pred_check_branch
      %44 = sbr.rel (0) target = $region21
    $region20: #{tpu_custom_call.1} parent=1 // pred_region
      %46 = dma.done [#allocation6], 9216
    $region21: #{tpu_custom_call.1} parent=1 // pred_fallthru
      _
    %v47 = vld [vmem:[#allocation2] sm:$0xff]
    %v48 = vld [vmem:[#allocation2 + $0x8] sm:$0xff]
    %v49 = vld [vmem:[#allocation2 + $0x10] sm:$0xff]
    %v50 = vld [vmem:[#allocation2 + $0x18] sm:$0xff]
    %v51 = vld [vmem:[#allocation5] sm:$0xff]
    %v52 = vld [vmem:[#allocation5 + $0x8] sm:$0xff]
    %v53 = vld [vmem:[#allocation5 + $0x10] sm:$0xff]
    %v54 = vld [vmem:[#allocation5 + $0x18] sm:$0xff]
    %v55 = vld [vmem:[#allocation5 + $0x20] sm:$0xff]
    %v56 = vld [vmem:[#allocation5 + $0x28] sm:$0xff]
    %v57 = vld [vmem:[#allocation5 + $0x30] sm:$0xff]
    %v58 = vld [vmem:[#allocation5 + $0x38] sm:$0xff]
    %v59 = vld [vmem:[#allocation5 + $0x40] sm:$0xff]
    %v60 = vld [vmem:[#allocation5 + $0x48] sm:$0xff]
    %v61 = vld [vmem:[#allocation5 + $0x50] sm:$0xff]
    %v62 = vld [vmem:[#allocation5 + $0x58] sm:$0xff]
    %v63 = vld [vmem:[#allocation5 + $0x60] sm:$0xff]
    %v64 = vld [vmem:[#allocation5 + $0x68] sm:$0xff]
    %v65 = vld [vmem:[#allocation5 + $0x70] sm:$0xff]
    %v66 = vld [vmem:[#allocation5 + $0x78] sm:$0xff]
    %v67 = vld [vmem:[#allocation5 + $0x80] sm:$0xff]
    %v68 = vld [vmem:[#allocation5 + $0x88] sm:$0xff]
    %v69 = vld [vmem:[#allocation5 + $0x90] sm:$0xff]
    %v70 = vld [vmem:[#allocation5 + $0x98] sm:$0xff]
    %v71 = vld [vmem:[#allocation5 + $0xa0] sm:$0xff]
    %v72 = vld [vmem:[#allocation5 + $0xa8] sm:$0xff]
    %v73 = vld [vmem:[#allocation5 + $0xb0] sm:$0xff]
    %v74 = vld [vmem:[#allocation5 + $0xb8] sm:$0xff]
    %v75 = vld [vmem:[#allocation5 + $0xc0] sm:$0xff]
    %v76 = vld [vmem:[#allocation5 + $0xc8] sm:$0xff]
    %v77 = vld [vmem:[#allocation5 + $0xd0] sm:$0xff]
    %v78 = vld [vmem:[#allocation5 + $0xd8] sm:$0xff]
    %v79 = vld [vmem:[#allocation5 + $0xe0] sm:$0xff]
    %v80 = vld [vmem:[#allocation5 + $0xe8] sm:$0xff]
    %v81 = vld [vmem:[#allocation5 + $0xf0] sm:$0xff]
    %v82 = vld [vmem:[#allocation5 + $0xf8] sm:$0xff]
    %v83 = vld [vmem:[#allocation5 + $0x100] sm:$0xff]
    %v84 = vld [vmem:[#allocation5 + $0x108] sm:$0xff]
    %v85 = vld [vmem:[#allocation5 + $0x110] sm:$0xff]
    %v86 = vld [vmem:[#allocation5 + $0x118] sm:$0xff]
    %v87 = vld [vmem:[#allocation5 + $0x120] sm:$0xff]
    %v88 = vld [vmem:[#allocation5 + $0x128] sm:$0xff]
    %v89 = vld [vmem:[#allocation5 + $0x130] sm:$0xff]
    %v90 = vld [vmem:[#allocation5 + $0x138] sm:$0xff]
    %v91 = vld [vmem:[#allocation5 + $0x140] sm:$0xff]
    %v92 = vld [vmem:[#allocation5 + $0x148] sm:$0xff]
    %v93 = vld [vmem:[#allocation5 + $0x150] sm:$0xff]
    %v94 = vld [vmem:[#allocation5 + $0x158] sm:$0xff]
    %v95 = vld [vmem:[#allocation5 + $0x160] sm:$0xff]
    %v96 = vld [vmem:[#allocation5 + $0x168] sm:$0xff]
    %v97 = vld [vmem:[#allocation5 + $0x170] sm:$0xff]
    %v98 = vld [vmem:[#allocation5 + $0x178] sm:$0xff]
    %v99 = vld [vmem:[#allocation5 + $0x180] sm:$0xff]
    %v100 = vld [vmem:[#allocation5 + $0x188] sm:$0xff]
    %v101 = vld [vmem:[#allocation5 + $0x190] sm:$0xff]
    %v102 = vld [vmem:[#allocation5 + $0x198] sm:$0xff]
    %v103 = vld [vmem:[#allocation5 + $0x1a0] sm:$0xff]
    %v104 = vld [vmem:[#allocation5 + $0x1a8] sm:$0xff]
    %v105 = vld [vmem:[#allocation5 + $0x1b0] sm:$0xff]
    %v106 = vld [vmem:[#allocation5 + $0x1b8] sm:$0xff]
    %v107 = vld [vmem:[#allocation5 + $0x1c0] sm:$0xff]
    %v108 = vld [vmem:[#allocation5 + $0x1c8] sm:$0xff]
    %v109 = vld [vmem:[#allocation5 + $0x1d0] sm:$0xff]
    %v110 = vld [vmem:[#allocation5 + $0x1d8] sm:$0xff]
    %v111 = vld [vmem:[#allocation5 + $0x1e0] sm:$0xff]
    %v112 = vld [vmem:[#allocation5 + $0x1e8] sm:$0xff]
    %v113 = vld [vmem:[#allocation5 + $0x1f0] sm:$0xff]
    %v114 = vld [vmem:[#allocation5 + $0x1f8] sm:$0xff]
    %v115 = vld [vmem:[#allocation5 + $0x200] sm:$0xff]
    %v116 = vld [vmem:[#allocation5 + $0x208] sm:$0xff]
    %v117 = vld [vmem:[#allocation5 + $0x210] sm:$0xff]
    %v118 = vld [vmem:[#allocation5 + $0x218] sm:$0xff]
    %v119 = vld [vmem:[#allocation5 + $0x220] sm:$0xff]
    %v120 = vld [vmem:[#allocation5 + $0x228] sm:$0xff]
    %v121 = vld [vmem:[#allocation5 + $0x230] sm:$0xff]
    %v122 = vld [vmem:[#allocation5 + $0x238] sm:$0xff]
    %v123 = vld [vmem:[%s2] sm:$0xff]
    %v124 = vld [vmem:[%s2 + $0x8] sm:$0xff]
    %126 = vset.pattern.permute.xlu0 0
    %127 = vperm.xlu0 %126, %v123
    %v128 = vpop.permute.xlu0 %127
    %131 = vset.pattern.permute.xlu0 0
    %132 = vperm.xlu0 %131, %v124
    %v133 = vpop.permute.xlu0 %132
    %vm135 = vcmask 130048
    %v137 = vsel %vm135, %v48, 0
    %v140 = vsel %vm135, %v50, 0
    %142 = vmatpush.msra.mxu0 %v111
    %143 = vmatpush.msra.mxu0 %v107
    %144 = vmatpush.msra.mxu0 %v103
    %145 = vmatpush.msra.mxu0 %v99
    %146 = vmatpush.msra.mxu0 %v95
    %147 = vmatpush.msra.mxu0 %v91
    %148 = vmatpush.msra.mxu0 %v87
    %149 = vmatpush.msra.mxu0 %v83
    %150 = vmatpush.msra.mxu0 %v79
    %151 = vmatpush.msra.mxu0 %v75
    %152 = vmatpush.msra.mxu0 %v71
    %153 = vmatpush.msra.mxu0 %v67
    %154 = vmatpush.msra.mxu0 %v63
    %155 = vmatpush.msra.mxu0 %v59
    %156 = vmatpush.msra.mxu0 %v55
    %157 = vmatpush.msra.mxu0 %v51
    %158 = vmatmul.f32.gmra.mxu0 %v47
    %v159 = vpop.f32.mrf.mxu0
    %v160 = vadd.f32 %v128, %v159
    %161 = vmatmul.f32.gmra.mxu0 %v49
    %v162 = vpop.f32.mrf.mxu0
    %v163 = vadd.f32 %v133, %v162
    %164 = vdwg.mxu0
    %165 = vmatpush.msra.mxu0 0.0
    %166 = vmatpush.msra.mxu0 0.0
    %167 = vmatpush.msra.mxu0 0.0
    %168 = vmatpush.msra.mxu0 0.0
    %169 = vmatpush.msra.mxu0 0.0
    %170 = vmatpush.msra.mxu0 0.0
    %171 = vmatpush.msra.mxu0 0.0
    %172 = vmatpush.msra.mxu0 0.0
    %173 = vmatpush.msra.mxu0 0.0
    %174 = vmatpush.msra.mxu0 0.0
    %175 = vmatpush.msra.mxu0 0.0
    %176 = vmatpush.msra.mxu0 0.0
    %177 = vmatpush.msra.mxu0 0.0
    %178 = vmatpush.msra.mxu0 0.0
    %179 = vmatpush.msra.mxu0 %v119
    %180 = vmatpush.msra.mxu0 %v115
    %181 = vmatmul.f32.gmra.mxu0 %v137
    %v182 = vpop.f32.mrf.mxu0
    %v183 = vadd.f32 %v160, %v182
    %184 = vmatmul.f32.gmra.mxu0 %v140
    %v185 = vpop.f32.mrf.mxu0
    %v186 = vadd.f32 %v163, %v185
    %187 = vdwg.mxu0
    %188 = vmatpush.msra.mxu0 %v112
    %189 = vmatpush.msra.mxu0 %v108
    %190 = vmatpush.msra.mxu0 %v104
    %191 = vmatpush.msra.mxu0 %v100
    %192 = vmatpush.msra.mxu0 %v96
    %193 = vmatpush.msra.mxu0 %v92
    %194 = vmatpush.msra.mxu0 %v88
    %195 = vmatpush.msra.mxu0 %v84
    %196 = vmatpush.msra.mxu0 %v80
    %197 = vmatpush.msra.mxu0 %v76
    %198 = vmatpush.msra.mxu0 %v72
    %199 = vmatpush.msra.mxu0 %v68
    %200 = vmatpush.msra.mxu0 %v64
    %201 = vmatpush.msra.mxu0 %v60
    %202 = vmatpush.msra.mxu0 %v56
    %203 = vmatpush.msra.mxu0 %v52
    %204 = vmatmul.f32.gmra.mxu0 %v47
    %v205 = vpop.f32.mrf.mxu0
    %v206 = vadd.f32 %v128, %v205
    %207 = vmatmul.f32.gmra.mxu0 %v49
    %v208 = vpop.f32.mrf.mxu0
    %v209 = vadd.f32 %v133, %v208
    %210 = vdwg.mxu0
    %211 = vmatpush.msra.mxu0 0.0
    %212 = vmatpush.msra.mxu0 0.0
    %213 = vmatpush.msra.mxu0 0.0
    %214 = vmatpush.msra.mxu0 0.0
    %215 = vmatpush.msra.mxu0 0.0
    %216 = vmatpush.msra.mxu0 0.0
    %217 = vmatpush.msra.mxu0 0.0
    %218 = vmatpush.msra.mxu0 0.0
    %219 = vmatpush.msra.mxu0 0.0
    %220 = vmatpush.msra.mxu0 0.0
    %221 = vmatpush.msra.mxu0 0.0
    %222 = vmatpush.msra.mxu0 0.0
    %223 = vmatpush.msra.mxu0 0.0
    %224 = vmatpush.msra.mxu0 0.0
    %225 = vmatpush.msra.mxu0 %v120
    %226 = vmatpush.msra.mxu0 %v116
    %227 = vmatmul.f32.gmra.mxu0 %v137
    %v228 = vpop.f32.mrf.mxu0
    %v229 = vadd.f32 %v206, %v228
    %230 = vmatmul.f32.gmra.mxu0 %v140
    %v231 = vpop.f32.mrf.mxu0
    %v232 = vadd.f32 %v209, %v231
    %233 = vdwg.mxu0
    %234 = vmatpush.msra.mxu0 %v113
    %235 = vmatpush.msra.mxu0 %v109
    %236 = vmatpush.msra.mxu0 %v105
    %237 = vmatpush.msra.mxu0 %v101
    %238 = vmatpush.msra.mxu0 %v97
    %239 = vmatpush.msra.mxu0 %v93
    %240 = vmatpush.msra.mxu0 %v89
    %241 = vmatpush.msra.mxu0 %v85
    %242 = vmatpush.msra.mxu0 %v81
    %243 = vmatpush.msra.mxu0 %v77
    %244 = vmatpush.msra.mxu0 %v73
    %245 = vmatpush.msra.mxu0 %v69
    %246 = vmatpush.msra.mxu0 %v65
    %247 = vmatpush.msra.mxu0 %v61
    %248 = vmatpush.msra.mxu0 %v57
    %249 = vmatpush.msra.mxu0 %v53
    %250 = vmatmul.f32.gmra.mxu0 %v47
    %v251 = vpop.f32.mrf.mxu0
    %v252 = vadd.f32 %v128, %v251
    %253 = vmatmul.f32.gmra.mxu0 %v49
    %v254 = vpop.f32.mrf.mxu0
    %v255 = vadd.f32 %v133, %v254
    %256 = vdwg.mxu0
    %257 = vmatpush.msra.mxu0 0.0
    %258 = vmatpush.msra.mxu0 0.0
    %259 = vmatpush.msra.mxu0 0.0
    %260 = vmatpush.msra.mxu0 0.0
    %261 = vmatpush.msra.mxu0 0.0
    %262 = vmatpush.msra.mxu0 0.0
    %263 = vmatpush.msra.mxu0 0.0
    %264 = vmatpush.msra.mxu0 0.0
    %265 = vmatpush.msra.mxu0 0.0
    %266 = vmatpush.msra.mxu0 0.0
    %267 = vmatpush.msra.mxu0 0.0
    %268 = vmatpush.msra.mxu0 0.0
    %269 = vmatpush.msra.mxu0 0.0
    %270 = vmatpush.msra.mxu0 0.0
    %271 = vmatpush.msra.mxu0 %v121
    %272 = vmatpush.msra.mxu0 %v117
    %273 = vmatmul.f32.gmra.mxu0 %v137
    %v274 = vpop.f32.mrf.mxu0
    %v275 = vadd.f32 %v252, %v274
    %276 = vmatmul.f32.gmra.mxu0 %v140
    %v277 = vpop.f32.mrf.mxu0
    %v278 = vadd.f32 %v255, %v277
    %279 = vdwg.mxu0
    %280 = vmatpush.msra.mxu0 %v114
    %281 = vmatpush.msra.mxu0 %v110
    %282 = vmatpush.msra.mxu0 %v106
    %283 = vmatpush.msra.mxu0 %v102
    %284 = vmatpush.msra.mxu0 %v98
    %285 = vmatpush.msra.mxu0 %v94
    %286 = vmatpush.msra.mxu0 %v90
    %287 = vmatpush.msra.mxu0 %v86
    %288 = vmatpush.msra.mxu0 %v82
    %289 = vmatpush.msra.mxu0 %v78
    %290 = vmatpush.msra.mxu0 %v74
    %291 = vmatpush.msra.mxu0 %v70
    %292 = vmatpush.msra.mxu0 %v66
    %293 = vmatpush.msra.mxu0 %v62
    %294 = vmatpush.msra.mxu0 %v58
    %295 = vmatpush.msra.mxu0 %v54
    %296 = vmatmul.f32.gmra.mxu0 %v47
    %v297 = vpop.f32.mrf.mxu0
    %v298 = vadd.f32 %v128, %v297
    %299 = vmatmul.f32.gmra.mxu0 %v49
    %v300 = vpop.f32.mrf.mxu0
    %v301 = vadd.f32 %v133, %v300
    %302 = vdwg.mxu0
    %303 = vmatpush.msra.mxu0 0.0
    %304 = vmatpush.msra.mxu0 0.0
    %305 = vmatpush.msra.mxu0 0.0
    %306 = vmatpush.msra.mxu0 0.0
    %307 = vmatpush.msra.mxu0 0.0
    %308 = vmatpush.msra.mxu0 0.0
    %309 = vmatpush.msra.mxu0 0.0
    %310 = vmatpush.msra.mxu0 0.0
    %311 = vmatpush.msra.mxu0 0.0
    %312 = vmatpush.msra.mxu0 0.0
    %313 = vmatpush.msra.mxu0 0.0
    %314 = vmatpush.msra.mxu0 0.0
    %315 = vmatpush.msra.mxu0 0.0
    %316 = vmatpush.msra.mxu0 0.0
    %317 = vmatpush.msra.mxu0 %v122
    %318 = vmatpush.msra.mxu0 %v118
    %319 = vmatmul.f32.gmra.mxu0 %v137
    %v320 = vpop.f32.mrf.mxu0
    %v321 = vadd.f32 %v298, %v320
    %322 = vmatmul.f32.gmra.mxu0 %v140
    %v323 = vpop.f32.mrf.mxu0
    %v324 = vadd.f32 %v301, %v323
    %325 = vdwg.mxu0
    %326 = vst [vmem:[#allocation7] sm:$0xff] %v183
    %327 = vst [vmem:[#allocation7 + $0x8] sm:$0xff] %v229
    %328 = vst [vmem:[#allocation7 + $0x10] sm:$0xff] %v275
    %329 = vst [vmem:[#allocation7 + $0x18] sm:$0xff] %v321
    %330 = vst [vmem:[#allocation7 + $0x20] sm:$0xff] %v186
    %331 = vst [vmem:[#allocation7 + $0x28] sm:$0xff] %v232
    %332 = vst [vmem:[#allocation7 + $0x30] sm:$0xff] %v278
    %333 = vst [vmem:[#allocation7 + $0x38] sm:$0xff] %v324
    // Predicated region
    $region22: #{tpu_custom_call.1} parent=1 // pred_check
      _
    $region23: #{tpu_custom_call.1} parent=1 // pred_check_branch
      %335 = sbr.rel (0) target = $region25
    $region24: #{tpu_custom_call.1} parent=1 // pred_region
      %337 = vsyncadd [#allocation4], 0
      %s338 = sshll.u32 [#allocation7], 4
      %s339 = int_to_ptr.vmem [resolvable:$true] %s338
      %s340 = sshll.u32 %s3, 4
      %s341 = int_to_ptr.hbm [resolvable:$true] %s340
      %346 = dma.vmem_to_hbm [thread:$0]  %s339, 1024, %s341, [#allocation4], 512, 512, 32
    $region25: #{tpu_custom_call.1} parent=1 // pred_fallthru
      _
    // Predicated region
    $region26: #{tpu_custom_call.1} parent=1 // pred_check
      _
    $region27: #{tpu_custom_call.1} parent=1 // pred_check_branch
      %348 = sbr.rel (0) target = $region29
    $region28: #{tpu_custom_call.1} parent=1 // pred_region
      %350 = dma.done [#allocation4], 1024
    $region29: #{tpu_custom_call.1} parent=1 // pred_fallthru
      _
    %351 = vsyncpa [#allocation3], 1
    %352 = vsyncpa [#allocation6], 1
    %353 = vsyncpa [#allocation4], 1

</llo_original>
